<compile_context>
chip_gen: v7x
topology: tpu7x:2x2x1
jax: 0.10.0
libtpu: 0.0.40
codegen_flags: <defaults>
</compile_context>

<pallas_src>
import functools

import jax
import jax.numpy as jnp
from jax import lax
from jax.experimental import pallas as pl
from jax.experimental.pallas import tpu as pltpu


def _round_up(a, b):
    return (a + b - 1) // b * b


def kgcn_fused_kernel(wsoft_ref, rs0_ref, rs1_ref, x_ref,
                      w1_ref, b1_ref, w2_ref, b2_ref, out_ref, *, num_layers):
    x = x_ref[...]                       # [T, Dp]  resident across all layers
    rs0 = rs0_ref[...]                   # [T, 1]   precomputed adj row sums
    rs1 = rs1_ref[...]                   # [T, 1]
    for l in range(num_layers):          # static unrolled loop (L is small)
        a0 = wsoft_ref[l, 0]             # softmaxed mixing weights (SMEM scalars)
        a1 = wsoft_ref[l, 1]
        # Row sums of the softmax-weighted adjacency, by linearity.
        deg = a0 * rs0 + a1 * rs1        # [T, 1]
        dn = lax.rsqrt(deg)              # diag(norm) as a row-wise scale
        # fc1(norm @ x)  (f32 MXU matmul; bf16 operands are an option on v6e/v7x
        # when F/H are large -- kept f32 here for exact parity at small dims)
        h = jnp.dot(dn * x, w1_ref[l],
                    preferred_element_type=jnp.float32) + b1_ref[l]
        h = jnp.maximum(h, 0.0)          # ReLU
        # fc2(norm @ h)
        y = jnp.dot(dn * h, w2_ref[l],
                    preferred_element_type=jnp.float32) + b2_ref[l]
        x = y + x                        # residual from K_GCN.forward
    out_ref[...] = x


def kgcn_forward(params, node_feature, adj_s):
    node_feature = jnp.asarray(node_feature, jnp.float32)
    adj_s = jnp.asarray(adj_s, jnp.float32)
    L = len(params)
    N, F = node_feature.shape
    H = params[0]["w1"].shape[1]
    # Residual connection in K_GCN.forward requires matching dims.
    assert F == H, "K_GCN residual connection requires f_dim == hidden_dim"
    D = F

    # Stack per-layer parameters (weights stored as [in, out] so kernel does x @ W + b).
    w1_all = jnp.stack([p["w1"] for p in params]).astype(jnp.float32)   # [L, D, D]
    b1_all = jnp.stack([p["b1"] for p in params]).astype(jnp.float32)   # [L, 1, D]
    w2_all = jnp.stack([p["w2"] for p in params]).astype(jnp.float32)   # [L, D, D]
    b2_all = jnp.stack([p["b2"] for p in params]).astype(jnp.float32)   # [L, 1, D]

    # Adjacency reduced to per-slice row sums once (never DMA'd per layer).
    if adj_s.ndim == 3 and adj_s.shape[0] == 2:
        mix = jnp.stack([p["mix_w"] for p in params]).astype(jnp.float32)  # [L, 2]
        w_soft = jax.nn.softmax(mix, axis=-1)
        rs0 = jnp.sum(adj_s[0], axis=1, keepdims=True)                     # [N, 1]
        rs1 = jnp.sum(adj_s[1], axis=1, keepdims=True)
    else:
        # torch branch: weighted_adj = adj_s directly (single adjacency);
        # express as weight (1, 0) on its row sum -- no duplication/stacking.
        adj2d = adj_s if adj_s.ndim == 2 else adj_s[0]
        w_soft = jnp.tile(jnp.array([[1.0, 0.0]], jnp.float32), (L, 1))
        rs0 = jnp.sum(adj2d, axis=1, keepdims=True)
        rs1 = jnp.zeros_like(rs0)

    # ----- pad to lane/sublane-friendly shapes --------------------------------
    D_pad = _round_up(max(D, 128), 128)        # lane-dense feature dim
    if N >= 512:
        tile_n = 512
    elif N >= 256:
        tile_n = 256
    else:
        tile_n = _round_up(N, 8)
    N_pad = _round_up(N, tile_n)

    x_p = jnp.zeros((N_pad, D_pad), jnp.float32).at[:N, :D].set(node_feature)
    # Padded rows get deg = a0*1 + a1*0 > 0  ->  no inf/NaN; sliced off below.
    rs0_p = jnp.ones((N_pad, 1), jnp.float32).at[:N].set(rs0)
    rs1_p = jnp.zeros((N_pad, 1), jnp.float32).at[:N].set(rs1)

    w1_p = jnp.zeros((L, D_pad, D_pad), jnp.float32).at[:, :D, :D].set(w1_all)
    w2_p = jnp.zeros((L, D_pad, D_pad), jnp.float32).at[:, :D, :D].set(w2_all)
    b1_p = jnp.zeros((L, 1, D_pad), jnp.float32).at[:, :, :D].set(b1_all)
    b2_p = jnp.zeros((L, 1, D_pad), jnp.float32).at[:, :, :D].set(b2_all)

    # ----- fused, row-tiled pallas_call ---------------------------------------
    grid = (N_pad // tile_n,)
    kernel = functools.partial(kgcn_fused_kernel, num_layers=L)
    # Default 32 MiB scoped VMEM is ample for these tiles (tile_n x D_pad blocks
    # + stacked [L, D_pad, D_pad] weights); raise vmem_limit_bytes for much
    # larger hidden dims if needed.
    out_p = pl.pallas_call(
        kernel,
        out_shape=jax.ShapeDtypeStruct((N_pad, D_pad), jnp.float32),
        grid=grid,
        in_specs=[
            pl.BlockSpec((L, 2), lambda i: (0, 0),
                         memory_space=pltpu.MemorySpace.SMEM),     # softmaxed mix weights
            pl.BlockSpec((tile_n, 1), lambda i: (i, 0)),           # rs0
            pl.BlockSpec((tile_n, 1), lambda i: (i, 0)),           # rs1
            pl.BlockSpec((tile_n, D_pad), lambda i: (i, 0)),       # x
            pl.BlockSpec((L, D_pad, D_pad), lambda i: (0, 0, 0)),  # w1 (all layers)
            pl.BlockSpec((L, 1, D_pad), lambda i: (0, 0, 0)),      # b1
            pl.BlockSpec((L, D_pad, D_pad), lambda i: (0, 0, 0)),  # w2
            pl.BlockSpec((L, 1, D_pad), lambda i: (0, 0, 0)),      # b2
        ],
        out_specs=pl.BlockSpec((tile_n, D_pad), lambda i: (i, 0)),
        compiler_params=pltpu.CompilerParams(
            dimension_semantics=("parallel",)),
    )(w_soft, rs0_p, rs1_p, x_p, w1_p, b1_p, w2_p, b2_p)

    return out_p[:N, :D]


kgcn_forward_jit = jax.jit(kgcn_forward)


def init_kgcn_params(key, num_layers, f_dim, hidden_dim):
    """Deterministic init mimicking nn.Linear defaults + torch.rand(2)."""
    params = []
    in_dims = [f_dim] + [hidden_dim] * (num_layers - 1)
    for li in range(num_layers):
        key, k1, k2, k3, k4, k5 = jax.random.split(key, 6)
        fin1 = in_dims[li]
        bound1 = 1.0 / float(fin1) ** 0.5
        bound2 = 1.0 / float(hidden_dim) ** 0.5
        w1 = jax.random.uniform(k1, (fin1, hidden_dim), jnp.float32, -bound1, bound1)
        b1 = jax.random.uniform(k2, (1, hidden_dim), jnp.float32, -bound1, bound1)
        w2 = jax.random.uniform(k3, (hidden_dim, hidden_dim), jnp.float32, -bound2, bound2)
        b2 = jax.random.uniform(k4, (1, hidden_dim), jnp.float32, -bound2, bound2)
        mix_w = jax.random.uniform(k5, (2,), jnp.float32, 0.0, 1.0)   # torch.rand(2)
        params.append(dict(w1=w1, b1=b1, w2=w2, b2=b2, mix_w=mix_w))
    return params


def kgcn_ref(params, node_feature, adj_s):
    """Pure-JAX reference mirroring the PyTorch forward."""
    x = node_feature
    for p in params:
        if adj_s.ndim == 3 and adj_s.shape[0] == 2:
            w = jax.nn.softmax(p["mix_w"])
            wadj = w[0] * adj_s[0] + w[1] * adj_s[1]
        else:
            wadj = adj_s if adj_s.ndim == 2 else adj_s[0]
        dn = jnp.sum(wadj, axis=1) ** (-0.5)
        h = (dn[:, None] * x) @ p["w1"] + p["b1"]
        h = jnp.maximum(h, 0.0)
        h = dn[:, None] * h
        y = h @ p["w2"] + p["b2"]
        x = y + x
    return x


if __name__ == "__main__":
    key = jax.random.PRNGKey(0)
    N, F, H, L = 16, 32, 32, 3   # residual in K_GCN requires F == H

    k_x, k_adj, k_p = jax.random.split(key, 3)
    node_feature = jax.random.normal(k_x, (N, F), jnp.float32)
    adj_s = jax.random.uniform(k_adj, (2, N, N), jnp.float32, minval=0.1, maxval=1.0)

    params = init_kgcn_params(k_p, L, F, H)

    out = kgcn_forward_jit(params, node_feature, adj_s)
    out = jax.block_until_ready(out)

    ref = kgcn_ref(params, node_feature, adj_s)
    assert out.shape == (N, H) and out.dtype == jnp.float32
    assert jnp.allclose(out, ref, atol=1e-2, rtol=1e-2), "mismatch vs reference"

    print("KERNEL_OK")
</pallas_src>

<mosaic_0001>
module attributes {stable_mosaic.version = 11 : i64} {
  func.func @kgcn_fused_kernel(%arg0: i32, %arg1: memref<3x2xf32, #tpu.memory_space<smem>>, %arg2: memref<16x1xf32, #tpu.memory_space<vmem>>, %arg3: memref<16x1xf32, #tpu.memory_space<vmem>>, %arg4: memref<16x128xf32, #tpu.memory_space<vmem>>, %arg5: memref<3x128x128xf32, #tpu.memory_space<vmem>>, %arg6: memref<3x1x128xf32, #tpu.memory_space<vmem>>, %arg7: memref<3x128x128xf32, #tpu.memory_space<vmem>>, %arg8: memref<3x1x128xf32, #tpu.memory_space<vmem>>, %arg9: memref<16x128xf32, #tpu.memory_space<vmem>>) attributes {dimension_semantics = [#tpu.dimension_semantics<parallel>], iteration_bounds = array<i64: 1>, scalar_prefetch = 0 : i64, scratch_operands = 0 : i64, tpu.core_type = #tpu.core_type<tc>, window_params = [{transform_indices = @transform_0, window_bounds = array<i64: 3, 2>}, {transform_indices = @transform_1, window_bounds = array<i64: 16, 1>}, {transform_indices = @transform_2, window_bounds = array<i64: 16, 1>}, {transform_indices = @transform_3, window_bounds = array<i64: 16, 128>}, {pipeline_mode = #tpu.pipeline_mode<synchronous>, transform_indices = @transform_4, window_bounds = array<i64: 3, 128, 128>}, {pipeline_mode = #tpu.pipeline_mode<synchronous>, transform_indices = @transform_5, window_bounds = array<i64: 3, 1, 128>}, {pipeline_mode = #tpu.pipeline_mode<synchronous>, transform_indices = @transform_6, window_bounds = array<i64: 3, 128, 128>}, {pipeline_mode = #tpu.pipeline_mode<synchronous>, transform_indices = @transform_7, window_bounds = array<i64: 3, 1, 128>}, {transform_indices = @transform_8, window_bounds = array<i64: 16, 128>}]} {
    %c0 = arith.constant 0 : index
    %c0_0 = arith.constant 0 : index
    %0 = vector.load %arg4[%c0, %c0_0] : memref<16x128xf32, #tpu.memory_space<vmem>>, vector<16x128xf32>
    %c0_1 = arith.constant 0 : index
    %c0_2 = arith.constant 0 : index
    %1 = vector.load %arg2[%c0_1, %c0_2] : memref<16x1xf32, #tpu.memory_space<vmem>>, vector<16x1xf32>
    %c0_3 = arith.constant 0 : index
    %c0_4 = arith.constant 0 : index
    %2 = vector.load %arg3[%c0_3, %c0_4] : memref<16x1xf32, #tpu.memory_space<vmem>>, vector<16x1xf32>
    %c0_5 = arith.constant 0 : index
    %c0_6 = arith.constant 0 : index
    %3 = memref.load %arg1[%c0_5, %c0_6] : memref<3x2xf32, #tpu.memory_space<smem>>
    %c0_7 = arith.constant 0 : index
    %c1 = arith.constant 1 : index
    %4 = memref.load %arg1[%c0_7, %c1] : memref<3x2xf32, #tpu.memory_space<smem>>
    %5 = vector.broadcast %3 : f32 to vector<16x1xf32>
    %6 = arith.mulf %5, %1 : vector<16x1xf32>
    %7 = vector.broadcast %4 : f32 to vector<16x1xf32>
    %8 = arith.mulf %7, %2 : vector<16x1xf32>
    %9 = arith.addf %6, %8 : vector<16x1xf32>
    %10 = math.rsqrt %9 : vector<16x1xf32>
    %11 = vector.broadcast %10 : vector<16x1xf32> to vector<16x128xf32>
    %12 = arith.mulf %11, %0 : vector<16x128xf32>
    %c0_8 = arith.constant 0 : index
    %c0_9 = arith.constant 0 : index
    %c0_10 = arith.constant 0 : index
    %13 = vector.load %arg5[%c0_8, %c0_9, %c0_10] : memref<3x128x128xf32, #tpu.memory_space<vmem>>, vector<1x128x128xf32>
    %14 = vector.shape_cast %13 : vector<1x128x128xf32> to vector<128x128xf32>
    %cst = arith.constant dense<0.000000e+00> : vector<16x128xf32>
    %15 = tpu.matmul %12, %14, %cst {dimension_numbers = #tpu.dot_dimension_numbers<[1], [0], [0], [1], [0, 0, 1, 1], [], []>} : vector<16x128xf32>, vector<128x128xf32>, vector<16x128xf32> -> vector<16x128xf32>
    %c0_11 = arith.constant 0 : index
    %c0_12 = arith.constant 0 : index
    %c0_13 = arith.constant 0 : index
    %16 = vector.load %arg6[%c0_11, %c0_12, %c0_13] : memref<3x1x128xf32, #tpu.memory_space<vmem>>, vector<1x1x128xf32>
    %17 = vector.shape_cast %16 : vector<1x1x128xf32> to vector<1x128xf32>
    %18 = vector.broadcast %17 : vector<1x128xf32> to vector<16x128xf32>
    %19 = arith.addf %15, %18 : vector<16x128xf32>
    %cst_14 = arith.constant 0.000000e+00 : f32
    %20 = vector.broadcast %cst_14 : f32 to vector<16x128xf32>
    %21 = arith.maximumf %19, %20 : vector<16x128xf32>
    %22 = vector.broadcast %10 : vector<16x1xf32> to vector<16x128xf32>
    %23 = arith.mulf %22, %21 : vector<16x128xf32>
    %c0_15 = arith.constant 0 : index
    %c0_16 = arith.constant 0 : index
    %c0_17 = arith.constant 0 : index
    %24 = vector.load %arg7[%c0_15, %c0_16, %c0_17] : memref<3x128x128xf32, #tpu.memory_space<vmem>>, vector<1x128x128xf32>
    %25 = vector.shape_cast %24 : vector<1x128x128xf32> to vector<128x128xf32>
    %cst_18 = arith.constant dense<0.000000e+00> : vector<16x128xf32>
    %26 = tpu.matmul %23, %25, %cst_18 {dimension_numbers = #tpu.dot_dimension_numbers<[1], [0], [0], [1], [0, 0, 1, 1], [], []>} : vector<16x128xf32>, vector<128x128xf32>, vector<16x128xf32> -> vector<16x128xf32>
    %c0_19 = arith.constant 0 : index
    %c0_20 = arith.constant 0 : index
    %c0_21 = arith.constant 0 : index
    %27 = vector.load %arg8[%c0_19, %c0_20, %c0_21] : memref<3x1x128xf32, #tpu.memory_space<vmem>>, vector<1x1x128xf32>
    %28 = vector.shape_cast %27 : vector<1x1x128xf32> to vector<1x128xf32>
    %29 = vector.broadcast %28 : vector<1x128xf32> to vector<16x128xf32>
    %30 = arith.addf %26, %29 : vector<16x128xf32>
    %31 = arith.addf %30, %0 : vector<16x128xf32>
    %c1_22 = arith.constant 1 : index
    %c0_23 = arith.constant 0 : index
    %32 = memref.load %arg1[%c1_22, %c0_23] : memref<3x2xf32, #tpu.memory_space<smem>>
    %c1_24 = arith.constant 1 : index
    %c1_25 = arith.constant 1 : index
    %33 = memref.load %arg1[%c1_24, %c1_25] : memref<3x2xf32, #tpu.memory_space<smem>>
    %34 = vector.broadcast %32 : f32 to vector<16x1xf32>
    %35 = arith.mulf %34, %1 : vector<16x1xf32>
    %36 = vector.broadcast %33 : f32 to vector<16x1xf32>
    %37 = arith.mulf %36, %2 : vector<16x1xf32>
    %38 = arith.addf %35, %37 : vector<16x1xf32>
    %39 = math.rsqrt %38 : vector<16x1xf32>
    %40 = vector.broadcast %39 : vector<16x1xf32> to vector<16x128xf32>
    %41 = arith.mulf %40, %31 : vector<16x128xf32>
    %c1_26 = arith.constant 1 : index
    %c0_27 = arith.constant 0 : index
    %c0_28 = arith.constant 0 : index
    %42 = vector.load %arg5[%c1_26, %c0_27, %c0_28] : memref<3x128x128xf32, #tpu.memory_space<vmem>>, vector<1x128x128xf32>
    %43 = vector.shape_cast %42 : vector<1x128x128xf32> to vector<128x128xf32>
    %cst_29 = arith.constant dense<0.000000e+00> : vector<16x128xf32>
    %44 = tpu.matmul %41, %43, %cst_29 {dimension_numbers = #tpu.dot_dimension_numbers<[1], [0], [0], [1], [0, 0, 1, 1], [], []>} : vector<16x128xf32>, vector<128x128xf32>, vector<16x128xf32> -> vector<16x128xf32>
    %c1_30 = arith.constant 1 : index
    %c0_31 = arith.constant 0 : index
    %c0_32 = arith.constant 0 : index
    %45 = vector.load %arg6[%c1_30, %c0_31, %c0_32] : memref<3x1x128xf32, #tpu.memory_space<vmem>>, vector<1x1x128xf32>
    %46 = vector.shape_cast %45 : vector<1x1x128xf32> to vector<1x128xf32>
    %47 = vector.broadcast %46 : vector<1x128xf32> to vector<16x128xf32>
    %48 = arith.addf %44, %47 : vector<16x128xf32>
    %cst_33 = arith.constant 0.000000e+00 : f32
    %49 = vector.broadcast %cst_33 : f32 to vector<16x128xf32>
    %50 = arith.maximumf %48, %49 : vector<16x128xf32>
    %51 = vector.broadcast %39 : vector<16x1xf32> to vector<16x128xf32>
    %52 = arith.mulf %51, %50 : vector<16x128xf32>
    %c1_34 = arith.constant 1 : index
    %c0_35 = arith.constant 0 : index
    %c0_36 = arith.constant 0 : index
    %53 = vector.load %arg7[%c1_34, %c0_35, %c0_36] : memref<3x128x128xf32, #tpu.memory_space<vmem>>, vector<1x128x128xf32>
    %54 = vector.shape_cast %53 : vector<1x128x128xf32> to vector<128x128xf32>
    %cst_37 = arith.constant dense<0.000000e+00> : vector<16x128xf32>
    %55 = tpu.matmul %52, %54, %cst_37 {dimension_numbers = #tpu.dot_dimension_numbers<[1], [0], [0], [1], [0, 0, 1, 1], [], []>} : vector<16x128xf32>, vector<128x128xf32>, vector<16x128xf32> -> vector<16x128xf32>
    %c1_38 = arith.constant 1 : index
    %c0_39 = arith.constant 0 : index
    %c0_40 = arith.constant 0 : index
    %56 = vector.load %arg8[%c1_38, %c0_39, %c0_40] : memref<3x1x128xf32, #tpu.memory_space<vmem>>, vector<1x1x128xf32>
    %57 = vector.shape_cast %56 : vector<1x1x128xf32> to vector<1x128xf32>
    %58 = vector.broadcast %57 : vector<1x128xf32> to vector<16x128xf32>
    %59 = arith.addf %55, %58 : vector<16x128xf32>
    %60 = arith.addf %59, %31 : vector<16x128xf32>
    %c2 = arith.constant 2 : index
    %c0_41 = arith.constant 0 : index
    %61 = memref.load %arg1[%c2, %c0_41] : memref<3x2xf32, #tpu.memory_space<smem>>
    %c2_42 = arith.constant 2 : index
    %c1_43 = arith.constant 1 : index
    %62 = memref.load %arg1[%c2_42, %c1_43] : memref<3x2xf32, #tpu.memory_space<smem>>
    %63 = vector.broadcast %61 : f32 to vector<16x1xf32>
    %64 = arith.mulf %63, %1 : vector<16x1xf32>
    %65 = vector.broadcast %62 : f32 to vector<16x1xf32>
    %66 = arith.mulf %65, %2 : vector<16x1xf32>
    %67 = arith.addf %64, %66 : vector<16x1xf32>
    %68 = math.rsqrt %67 : vector<16x1xf32>
    %69 = vector.broadcast %68 : vector<16x1xf32> to vector<16x128xf32>
    %70 = arith.mulf %69, %60 : vector<16x128xf32>
    %c2_44 = arith.constant 2 : index
    %c0_45 = arith.constant 0 : index
    %c0_46 = arith.constant 0 : index
    %71 = vector.load %arg5[%c2_44, %c0_45, %c0_46] : memref<3x128x128xf32, #tpu.memory_space<vmem>>, vector<1x128x128xf32>
    %72 = vector.shape_cast %71 : vector<1x128x128xf32> to vector<128x128xf32>
    %cst_47 = arith.constant dense<0.000000e+00> : vector<16x128xf32>
    %73 = tpu.matmul %70, %72, %cst_47 {dimension_numbers = #tpu.dot_dimension_numbers<[1], [0], [0], [1], [0, 0, 1, 1], [], []>} : vector<16x128xf32>, vector<128x128xf32>, vector<16x128xf32> -> vector<16x128xf32>
    %c2_48 = arith.constant 2 : index
    %c0_49 = arith.constant 0 : index
    %c0_50 = arith.constant 0 : index
    %74 = vector.load %arg6[%c2_48, %c0_49, %c0_50] : memref<3x1x128xf32, #tpu.memory_space<vmem>>, vector<1x1x128xf32>
    %75 = vector.shape_cast %74 : vector<1x1x128xf32> to vector<1x128xf32>
    %76 = vector.broadcast %75 : vector<1x128xf32> to vector<16x128xf32>
    %77 = arith.addf %73, %76 : vector<16x128xf32>
    %cst_51 = arith.constant 0.000000e+00 : f32
    %78 = vector.broadcast %cst_51 : f32 to vector<16x128xf32>
    %79 = arith.maximumf %77, %78 : vector<16x128xf32>
    %80 = vector.broadcast %68 : vector<16x1xf32> to vector<16x128xf32>
    %81 = arith.mulf %80, %79 : vector<16x128xf32>
    %c2_52 = arith.constant 2 : index
    %c0_53 = arith.constant 0 : index
    %c0_54 = arith.constant 0 : index
    %82 = vector.load %arg7[%c2_52, %c0_53, %c0_54] : memref<3x128x128xf32, #tpu.memory_space<vmem>>, vector<1x128x128xf32>
    %83 = vector.shape_cast %82 : vector<1x128x128xf32> to vector<128x128xf32>
    %cst_55 = arith.constant dense<0.000000e+00> : vector<16x128xf32>
    %84 = tpu.matmul %81, %83, %cst_55 {dimension_numbers = #tpu.dot_dimension_numbers<[1], [0], [0], [1], [0, 0, 1, 1], [], []>} : vector<16x128xf32>, vector<128x128xf32>, vector<16x128xf32> -> vector<16x128xf32>
    %c2_56 = arith.constant 2 : index
    %c0_57 = arith.constant 0 : index
    %c0_58 = arith.constant 0 : index
    %85 = vector.load %arg8[%c2_56, %c0_57, %c0_58] : memref<3x1x128xf32, #tpu.memory_space<vmem>>, vector<1x1x128xf32>
    %86 = vector.shape_cast %85 : vector<1x1x128xf32> to vector<1x128xf32>
    %87 = vector.broadcast %86 : vector<1x128xf32> to vector<16x128xf32>
    %88 = arith.addf %84, %87 : vector<16x128xf32>
    %89 = arith.addf %88, %60 : vector<16x128xf32>
    %c0_59 = arith.constant 0 : index
    %c0_60 = arith.constant 0 : index
    %90 = vector.load %arg9[%c0_59, %c0_60] : memref<16x128xf32, #tpu.memory_space<vmem>>, vector<16x128xf32>
    tpu.vector_store %arg9[%c0_59, %c0_60], %89 {strides = array<i32>} : memref<16x128xf32, #tpu.memory_space<vmem>>, vector<16x128xf32>,
    return
  }
  func.func @transform_0(%arg0: i32) -> (i32, i32) {
    %c0_i32 = arith.constant 0 : i32
    %c0_i32_0 = arith.constant 0 : i32
    %c0_i32_1 = arith.constant 0 : i32
    return %c0_i32, %c0_i32_0 : i32, i32
  }
  func.func @transform_1(%arg0: i32) -> (i32, i32) {
    %c0_i32 = arith.constant 0 : i32
    %c0_i32_0 = arith.constant 0 : i32
    return %arg0, %c0_i32 : i32, i32
  }
  func.func @transform_2(%arg0: i32) -> (i32, i32) {
    %c0_i32 = arith.constant 0 : i32
    %c0_i32_0 = arith.constant 0 : i32
    return %arg0, %c0_i32 : i32, i32
  }
  func.func @transform_3(%arg0: i32) -> (i32, i32) {
    %c0_i32 = arith.constant 0 : i32
    %c0_i32_0 = arith.constant 0 : i32
    return %arg0, %c0_i32 : i32, i32
  }
  func.func @transform_4(%arg0: i32) -> (i32, i32, i32) {
    %c0_i32 = arith.constant 0 : i32
    %c0_i32_0 = arith.constant 0 : i32
    %c0_i32_1 = arith.constant 0 : i32
    %c0_i32_2 = arith.constant 0 : i32
    return %c0_i32, %c0_i32_0, %c0_i32_1 : i32, i32, i32
  }
  func.func @transform_5(%arg0: i32) -> (i32, i32, i32) {
    %c0_i32 = arith.constant 0 : i32
    %c0_i32_0 = arith.constant 0 : i32
    %c0_i32_1 = arith.constant 0 : i32
    %c0_i32_2 = arith.constant 0 : i32
    return %c0_i32, %c0_i32_0, %c0_i32_1 : i32, i32, i32
  }
  func.func @transform_6(%arg0: i32) -> (i32, i32, i32) {
    %c0_i32 = arith.constant 0 : i32
    %c0_i32_0 = arith.constant 0 : i32
    %c0_i32_1 = arith.constant 0 : i32
    %c0_i32_2 = arith.constant 0 : i32
    return %c0_i32, %c0_i32_0, %c0_i32_1 : i32, i32, i32
  }
  func.func @transform_7(%arg0: i32) -> (i32, i32, i32) {
    %c0_i32 = arith.constant 0 : i32
    %c0_i32_0 = arith.constant 0 : i32
    %c0_i32_1 = arith.constant 0 : i32
    %c0_i32_2 = arith.constant 0 : i32
    return %c0_i32, %c0_i32_0, %c0_i32_1 : i32, i32, i32
  }
  func.func @transform_8(%arg0: i32) -> (i32, i32) {
    %c0_i32 = arith.constant 0 : i32
    %c0_i32_0 = arith.constant 0 : i32
    return %arg0, %c0_i32 : i32, i32
  }
}

</mosaic_0001>

<llo_original>
// kernel: kgcn_forward.1
$region0: #{kgcn_forward.1}
  #allocation0 [shape = 'u32[]', space=smem, size = 0x4, offset = 0x4, fixed_abs, tag = 'smem constant byte address 0x4 - core index']
  #allocation1 [shape = 'u32[144,128]{1,0:T(1,128)}', space=vmem, size = 0x12000, scoped, tag = 'internal scratch']
  %s0 = inlined_call_operand.vmem [shape: f32[3,2], index: 0, kind: input, shape index: {}]
  %s1 = inlined_call_operand.vmem [shape: f32[16,1], index: 1, kind: input, shape index: {}]
  %s2 = inlined_call_operand.vmem [shape: f32[16,1], index: 2, kind: input, shape index: {}]
  %s3 = inlined_call_operand.vmem [shape: f32[16,128], index: 3, kind: input, shape index: {}]
  %s4 = inlined_call_operand.vmem [shape: f32[3,128,128], index: 4, kind: input, shape index: {}]
  %s5 = inlined_call_operand.vmem [shape: f32[3,1,128], index: 5, kind: input, shape index: {}]
  %s6 = inlined_call_operand.vmem [shape: f32[3,128,128], index: 6, kind: input, shape index: {}]
  %s7 = inlined_call_operand.vmem [shape: f32[3,1,128], index: 7, kind: input, shape index: {}]
  %s8 = inlined_call_operand.hbm [shape: f32[16,128], index: 8, kind: output, shape index: {}]
  %s9 = sld [smem:[#allocation0]]
  $region46: #{kgcn_forward.1} parent=0
    _
  %s11 = ssub.s32 1, %s9
  %s12 = scalar_select 0, %s11, %s9
  $region1: #{kgcn_forward.1} parent=0
    #allocation2 [shape = 'u8[2048]{0}', space=smem, size = 0x800, scoped, tag = 'input window, operand 0, single buffered']
    #allocation3 [shape = 's32[1]{0}', space=sflag, size = 0x4, scoped, tag = 'scoped memory for kgcn_forward.1']
    #allocation4 [shape = 's32[1]{0}', space=sflag, size = 0x4, scoped, tag = 'scoped memory for kgcn_forward.1']
    #allocation5 [shape = 'u8[8192]{0}', space=vmem, size = 0x2000, scoped, tag = 'output window, operand 0, single buffered']
    %13 = vsyncpa [#allocation4], 0
    %14 = vsyncpa [#allocation3], 0
    // Predicated region
    $region2: #{kgcn_forward.1} parent=1 // pred_check
      _
    $region3: #{kgcn_forward.1} parent=1 // pred_check_branch
      %16 = sbr.rel (0) target = $region5
    $region4: #{kgcn_forward.1} parent=1 // pred_region
      %s18 = ssub.s32 64, 64
      %19 = vsyncadd [#allocation4], %s18
      %s21 = sshll.u32 %s0, 4
      %s22 = int_to_ptr.vmem [resolvable:$true] %s21
      %24 = dma.vmem_to_smem %s22, 64, [#allocation2], [#allocation4]
    $region5: #{kgcn_forward.1} parent=1 // pred_fallthru
      _
    // Predicated region
    $region6: #{kgcn_forward.1} parent=1 // pred_check
      _
    $region7: #{kgcn_forward.1} parent=1 // pred_check_branch
      %26 = sbr.rel (0) target = $region9
    $region8: #{kgcn_forward.1} parent=1 // pred_region
      _
    $region9: #{kgcn_forward.1} parent=1 // pred_fallthru
      _
    // Predicated region
    $region10: #{kgcn_forward.1} parent=1 // pred_check
      _
    $region11: #{kgcn_forward.1} parent=1 // pred_check_branch
      %28 = sbr.rel (0) target = $region13
    $region12: #{kgcn_forward.1} parent=1 // pred_region
      _
    $region13: #{kgcn_forward.1} parent=1 // pred_fallthru
      _
    // Predicated region
    $region14: #{kgcn_forward.1} parent=1 // pred_check
      _
    $region15: #{kgcn_forward.1} parent=1 // pred_check_branch
      %30 = sbr.rel (0) target = $region17
    $region16: #{kgcn_forward.1} parent=1 // pred_region
      _
    $region17: #{kgcn_forward.1} parent=1 // pred_fallthru
      _
    // Predicated region
    $region18: #{kgcn_forward.1} parent=1 // pred_check
      _
    $region19: #{kgcn_forward.1} parent=1 // pred_check_branch
      %32 = sbr.rel (0) target = $region21
    $region20: #{kgcn_forward.1} parent=1 // pred_region
      _
    $region21: #{kgcn_forward.1} parent=1 // pred_fallthru
      _
    // Predicated region
    $region22: #{kgcn_forward.1} parent=1 // pred_check
      _
    $region23: #{kgcn_forward.1} parent=1 // pred_check_branch
      %34 = sbr.rel (0) target = $region25
    $region24: #{kgcn_forward.1} parent=1 // pred_region
      _
    $region25: #{kgcn_forward.1} parent=1 // pred_fallthru
      _
    // Predicated region
    $region26: #{kgcn_forward.1} parent=1 // pred_check
      _
    $region27: #{kgcn_forward.1} parent=1 // pred_check_branch
      %36 = sbr.rel (0) target = $region29
    $region28: #{kgcn_forward.1} parent=1 // pred_region
      _
    $region29: #{kgcn_forward.1} parent=1 // pred_fallthru
      _
    // Predicated region
    $region30: #{kgcn_forward.1} parent=1 // pred_check
      _
    $region31: #{kgcn_forward.1} parent=1 // pred_check_branch
      %38 = sbr.rel (0) target = $region33
    $region32: #{kgcn_forward.1} parent=1 // pred_region
      _
    $region33: #{kgcn_forward.1} parent=1 // pred_fallthru
      _
    // Predicated region
    $region34: #{kgcn_forward.1} parent=1 // pred_check
      _
    $region35: #{kgcn_forward.1} parent=1 // pred_check_branch
      %40 = sbr.rel (0) target = $region37
    $region36: #{kgcn_forward.1} parent=1 // pred_region
      %41 = dma.done [#allocation4], 64
    $region37: #{kgcn_forward.1} parent=1 // pred_fallthru
      _
    %42 = sfence
    %v43 = vld [vmem:[%s3] sm:$0xff]
    %v44 = vld [vmem:[%s3 + $0x8] sm:$0xff]
    %v45 = vld [vmem:[%s1] sm:$0xff]
    %v46 = vld [vmem:[%s1 + $0x8] sm:$0xff]
    %v47 = vld [vmem:[%s2] sm:$0xff]
    %v48 = vld [vmem:[%s2 + $0x8] sm:$0xff]
    %s49 = sld [smem:[#allocation2]]
    %s50 = sld [smem:[#allocation2 + $0x1]]
    %v51 = vstv %s49
    %v52 = vmul.f32 %v51, %v45
    %v53 = vmul.f32 %v51, %v46
    %v54 = vstv %s50
    %v55 = vmul.f32 %v54, %v47
    %v56 = vmul.f32 %v54, %v48
    %v57 = vadd.f32 %v52, %v55
    %v58 = vadd.f32 %v53, %v56
    %v59 = vrsqrt.pop %v57
    %v60 = vrsqrt.pop %v58
    %62 = vset.pattern.permute.xlu0 0
    %63 = vperm.xlu0 %62, %v59
    %v64 = vpop.permute.xlu0 %63
    %67 = vset.pattern.permute.xlu0 0
    %68 = vperm.xlu0 %67, %v60
    %v69 = vpop.permute.xlu0 %68
    %v71 = vmul.f32 %v64, %v43
    %v72 = vmul.f32 %v69, %v44
    %v73 = vld [vmem:[%s4] sm:$0xff]
    %v74 = vld [vmem:[%s4 + $0x8] sm:$0xff]
    %v75 = vld [vmem:[%s4 + $0x10] sm:$0xff]
    %v76 = vld [vmem:[%s4 + $0x18] sm:$0xff]
    %v77 = vld [vmem:[%s4 + $0x20] sm:$0xff]
    %v78 = vld [vmem:[%s4 + $0x28] sm:$0xff]
    %v79 = vld [vmem:[%s4 + $0x30] sm:$0xff]
    %v80 = vld [vmem:[%s4 + $0x38] sm:$0xff]
    %v81 = vld [vmem:[%s4 + $0x40] sm:$0xff]
    %v82 = vld [vmem:[%s4 + $0x48] sm:$0xff]
    %v83 = vld [vmem:[%s4 + $0x50] sm:$0xff]
    %v84 = vld [vmem:[%s4 + $0x58] sm:$0xff]
    %v85 = vld [vmem:[%s4 + $0x60] sm:$0xff]
    %v86 = vld [vmem:[%s4 + $0x68] sm:$0xff]
    %v87 = vld [vmem:[%s4 + $0x70] sm:$0xff]
    %v88 = vld [vmem:[%s4 + $0x78] sm:$0xff]
    %v89 = vld [vmem:[%s5] sm:$0x1]
    %v91 = vlaneseq
    %v92 = vshrl.u32 %v91, 7
    %v93 = vsub.s32 0, %v92
    %v94 = vrot.slane %v89, %v93
    %96 = vmatprep.subr.mxu0 0.0
    %97 = vmatpush1.msra.mxu0 %v73
    %98 = vmatprep.subr.mxu0 0.0
    %99 = vmatpush1.msra.mxu0 %v74
    %100 = vmatprep.subr.mxu0 0.0
    %101 = vmatpush1.msra.mxu0 %v75
    %102 = vmatprep.subr.mxu0 0.0
    %103 = vmatpush1.msra.mxu0 %v76
    %104 = vmatprep.subr.mxu0 0.0
    %105 = vmatpush1.msra.mxu0 %v77
    %106 = vmatprep.subr.mxu0 0.0
    %107 = vmatpush1.msra.mxu0 %v78
    %108 = vmatprep.subr.mxu0 0.0
    %109 = vmatpush1.msra.mxu0 %v79
    %110 = vmatprep.subr.mxu0 0.0
    %111 = vmatpush1.msra.mxu0 %v80
    %112 = vmatprep.subr.mxu0 0.0
    %113 = vmatpush1.msra.mxu0 %v81
    %114 = vmatprep.subr.mxu0 0.0
    %115 = vmatpush1.msra.mxu0 %v82
    %116 = vmatprep.subr.mxu0 0.0
    %117 = vmatpush1.msra.mxu0 %v83
    %118 = vmatprep.subr.mxu0 0.0
    %119 = vmatpush1.msra.mxu0 %v84
    %120 = vmatprep.subr.mxu0 0.0
    %121 = vmatpush1.msra.mxu0 %v85
    %122 = vmatprep.subr.mxu0 0.0
    %123 = vmatpush1.msra.mxu0 %v86
    %124 = vmatprep.subr.mxu0 0.0
    %125 = vmatpush1.msra.mxu0 %v87
    %126 = vmatprep.subr.mxu0 0.0
    %127 = vmatpush1.msra.mxu0 %v88
    %128 = vmatprep.subr.mxu0 0.0
    %129 = vmatpush1.msra.mxu0 0.0
    %130 = vmatprep.subr.mxu0 0.0
    %131 = vmatpush1.msra.mxu0 0.0
    %132 = vmatprep.subr.mxu0 0.0
    %133 = vmatpush1.msra.mxu0 0.0
    %134 = vmatprep.subr.mxu0 0.0
    %135 = vmatpush1.msra.mxu0 0.0
    %136 = vmatprep.subr.mxu0 0.0
    %137 = vmatpush1.msra.mxu0 0.0
    %138 = vmatprep.subr.mxu0 0.0
    %139 = vmatpush1.msra.mxu0 0.0
    %140 = vmatprep.subr.mxu0 0.0
    %141 = vmatpush1.msra.mxu0 0.0
    %142 = vmatprep.subr.mxu0 0.0
    %143 = vmatpush1.msra.mxu0 0.0
    %144 = vmatprep.subr.mxu0 0.0
    %145 = vmatpush1.msra.mxu0 0.0
    %146 = vmatprep.subr.mxu0 0.0
    %147 = vmatpush1.msra.mxu0 0.0
    %148 = vmatprep.subr.mxu0 0.0
    %149 = vmatpush1.msra.mxu0 0.0
    %150 = vmatprep.subr.mxu0 0.0
    %151 = vmatpush1.msra.mxu0 0.0
    %152 = vmatprep.subr.mxu0 0.0
    %153 = vmatpush1.msra.mxu0 0.0
    %154 = vmatprep.subr.mxu0 0.0
    %155 = vmatpush1.msra.mxu0 0.0
    %156 = vmatprep.subr.mxu0 0.0
    %157 = vmatpush1.msra.mxu0 0.0
    %158 = vmatprep.subr.mxu0 0.0
    %159 = vmatpush1.msra.mxu0 0.0
    %160 = vmatprep.mubr.f32.mxu0 0.0
    %161 = vmatmul.mubr.f32.gmra.mrb[0].mxu0 %v71
    %v162 = vpop.f32.mrb[0].mxu0
    %v163 = vadd.f32 %v94, %v162
    %v164 = vpop.f32.mrb[0].mxu0
    %165 = vmatprep.mubr.f32.mxu0 0.0
    %166 = vmatmul.mubr.f32.gmra.mrb[0].mxu0 %v72
    %v167 = vpop.f32.mrb[0].mxu0
    %v168 = vadd.f32 %v94, %v167
    %v169 = vpop.f32.mrb[0].mxu0
    %170 = vdwg.mxu0
    %v171 = vmax.f32 %v163, 0.0
    %v172 = vmax.f32 %v168, 0.0
    %v173 = vmul.f32 %v64, %v171
    %v174 = vmul.f32 %v69, %v172
    %v175 = vld [vmem:[%s6] sm:$0xff]
    %v176 = vld [vmem:[%s6 + $0x8] sm:$0xff]
    %v177 = vld [vmem:[%s6 + $0x10] sm:$0xff]
    %v178 = vld [vmem:[%s6 + $0x18] sm:$0xff]
    %v179 = vld [vmem:[%s6 + $0x20] sm:$0xff]
    %v180 = vld [vmem:[%s6 + $0x28] sm:$0xff]
    %v181 = vld [vmem:[%s6 + $0x30] sm:$0xff]
    %v182 = vld [vmem:[%s6 + $0x38] sm:$0xff]
    %v183 = vld [vmem:[%s6 + $0x40] sm:$0xff]
    %v184 = vld [vmem:[%s6 + $0x48] sm:$0xff]
    %v185 = vld [vmem:[%s6 + $0x50] sm:$0xff]
    %v186 = vld [vmem:[%s6 + $0x58] sm:$0xff]
    %v187 = vld [vmem:[%s6 + $0x60] sm:$0xff]
    %v188 = vld [vmem:[%s6 + $0x68] sm:$0xff]
    %v189 = vld [vmem:[%s6 + $0x70] sm:$0xff]
    %v190 = vld [vmem:[%s6 + $0x78] sm:$0xff]
    %v191 = vld [vmem:[%s7] sm:$0x1]
    %v193 = vlaneseq
    %v194 = vshrl.u32 %v193, 7
    %v195 = vsub.s32 0, %v194
    %v196 = vrot.slane %v191, %v195
    %198 = vmatprep.subr.mxu0 0.0
    %199 = vmatpush1.msra.mxu0 %v175
    %200 = vmatprep.subr.mxu0 0.0
    %201 = vmatpush1.msra.mxu0 %v176
    %202 = vmatprep.subr.mxu0 0.0
    %203 = vmatpush1.msra.mxu0 %v177
    %204 = vmatprep.subr.mxu0 0.0
    %205 = vmatpush1.msra.mxu0 %v178
    %206 = vmatprep.subr.mxu0 0.0
    %207 = vmatpush1.msra.mxu0 %v179
    %208 = vmatprep.subr.mxu0 0.0
    %209 = vmatpush1.msra.mxu0 %v180
    %210 = vmatprep.subr.mxu0 0.0
    %211 = vmatpush1.msra.mxu0 %v181
    %212 = vmatprep.subr.mxu0 0.0
    %213 = vmatpush1.msra.mxu0 %v182
    %214 = vmatprep.subr.mxu0 0.0
    %215 = vmatpush1.msra.mxu0 %v183
    %216 = vmatprep.subr.mxu0 0.0
    %217 = vmatpush1.msra.mxu0 %v184
    %218 = vmatprep.subr.mxu0 0.0
    %219 = vmatpush1.msra.mxu0 %v185
    %220 = vmatprep.subr.mxu0 0.0
    %221 = vmatpush1.msra.mxu0 %v186
    %222 = vmatprep.subr.mxu0 0.0
    %223 = vmatpush1.msra.mxu0 %v187
    %224 = vmatprep.subr.mxu0 0.0
    %225 = vmatpush1.msra.mxu0 %v188
    %226 = vmatprep.subr.mxu0 0.0
    %227 = vmatpush1.msra.mxu0 %v189
    %228 = vmatprep.subr.mxu0 0.0
    %229 = vmatpush1.msra.mxu0 %v190
    %230 = vmatprep.subr.mxu0 0.0
    %231 = vmatpush1.msra.mxu0 0.0
    %232 = vmatprep.subr.mxu0 0.0
    %233 = vmatpush1.msra.mxu0 0.0
    %234 = vmatprep.subr.mxu0 0.0
    %235 = vmatpush1.msra.mxu0 0.0
    %236 = vmatprep.subr.mxu0 0.0
    %237 = vmatpush1.msra.mxu0 0.0
    %238 = vmatprep.subr.mxu0 0.0
    %239 = vmatpush1.msra.mxu0 0.0
    %240 = vmatprep.subr.mxu0 0.0
    %241 = vmatpush1.msra.mxu0 0.0
    %242 = vmatprep.subr.mxu0 0.0
    %243 = vmatpush1.msra.mxu0 0.0
    %244 = vmatprep.subr.mxu0 0.0
    %245 = vmatpush1.msra.mxu0 0.0
    %246 = vmatprep.subr.mxu0 0.0
    %247 = vmatpush1.msra.mxu0 0.0
    %248 = vmatprep.subr.mxu0 0.0
    %249 = vmatpush1.msra.mxu0 0.0
    %250 = vmatprep.subr.mxu0 0.0
    %251 = vmatpush1.msra.mxu0 0.0
    %252 = vmatprep.subr.mxu0 0.0
    %253 = vmatpush1.msra.mxu0 0.0
    %254 = vmatprep.subr.mxu0 0.0
    %255 = vmatpush1.msra.mxu0 0.0
    %256 = vmatprep.subr.mxu0 0.0
    %257 = vmatpush1.msra.mxu0 0.0
    %258 = vmatprep.subr.mxu0 0.0
    %259 = vmatpush1.msra.mxu0 0.0
    %260 = vmatprep.subr.mxu0 0.0
    %261 = vmatpush1.msra.mxu0 0.0
    %262 = vmatprep.mubr.f32.mxu0 0.0
    %263 = vmatmul.mubr.f32.gmra.mrb[0].mxu0 %v173
    %v264 = vpop.f32.mrb[0].mxu0
    %v265 = vadd.f32 %v196, %v264
    %v266 = vpop.f32.mrb[0].mxu0
    %267 = vmatprep.mubr.f32.mxu0 0.0
    %268 = vmatmul.mubr.f32.gmra.mrb[0].mxu0 %v174
    %v269 = vpop.f32.mrb[0].mxu0
    %v270 = vadd.f32 %v196, %v269
    %v271 = vpop.f32.mrb[0].mxu0
    %272 = vdwg.mxu0
    %v273 = vadd.f32 %v265, %v43
    %v274 = vadd.f32 %v270, %v44
    %s275 = sld [smem:[#allocation2 + $0x80]]
    %s276 = sld [smem:[#allocation2 + $0x81]]
    %v277 = vstv %s275
    %v278 = vmul.f32 %v277, %v45
    %v279 = vmul.f32 %v277, %v46
    %v280 = vstv %s276
    %v281 = vmul.f32 %v280, %v47
    %v282 = vmul.f32 %v280, %v48
    %v283 = vadd.f32 %v278, %v281
    %v284 = vadd.f32 %v279, %v282
    %v285 = vrsqrt.pop %v283
    %v286 = vrsqrt.pop %v284
    %288 = vset.pattern.permute.xlu0 0
    %289 = vperm.xlu0 %288, %v285
    %v290 = vpop.permute.xlu0 %289
    %293 = vset.pattern.permute.xlu0 0
    %294 = vperm.xlu0 %293, %v286
    %v295 = vpop.permute.xlu0 %294
    %v297 = vmul.f32 %v290, %v273
    %v298 = vmul.f32 %v295, %v274
    %s299 = scalar_lea.vmem %s4, 128
    %v300 = vld [vmem:[%s299] sm:$0xff]
    %v301 = vld [vmem:[%s299 + $0x8] sm:$0xff]
    %v302 = vld [vmem:[%s299 + $0x10] sm:$0xff]
    %v303 = vld [vmem:[%s299 + $0x18] sm:$0xff]
    %v304 = vld [vmem:[%s299 + $0x20] sm:$0xff]
    %v305 = vld [vmem:[%s299 + $0x28] sm:$0xff]
    %v306 = vld [vmem:[%s299 + $0x30] sm:$0xff]
    %v307 = vld [vmem:[%s299 + $0x38] sm:$0xff]
    %v308 = vld [vmem:[%s299 + $0x40] sm:$0xff]
    %v309 = vld [vmem:[%s299 + $0x48] sm:$0xff]
    %v310 = vld [vmem:[%s299 + $0x50] sm:$0xff]
    %v311 = vld [vmem:[%s299 + $0x58] sm:$0xff]
    %v312 = vld [vmem:[%s299 + $0x60] sm:$0xff]
    %v313 = vld [vmem:[%s299 + $0x68] sm:$0xff]
    %v314 = vld [vmem:[%s299 + $0x70] sm:$0xff]
    %v315 = vld [vmem:[%s299 + $0x78] sm:$0xff]
    %s316 = scalar_lea.vmem %s5, 1
    %v317 = vld [vmem:[%s316] sm:$0x1]
    %v319 = vlaneseq
    %v320 = vshrl.u32 %v319, 7
    %v321 = vsub.s32 0, %v320
    %v322 = vrot.slane %v317, %v321
    %324 = vmatprep.subr.mxu0 0.0
    %325 = vmatpush1.msra.mxu0 %v300
    %326 = vmatprep.subr.mxu0 0.0
    %327 = vmatpush1.msra.mxu0 %v301
    %328 = vmatprep.subr.mxu0 0.0
    %329 = vmatpush1.msra.mxu0 %v302
    %330 = vmatprep.subr.mxu0 0.0
    %331 = vmatpush1.msra.mxu0 %v303
    %332 = vmatprep.subr.mxu0 0.0
    %333 = vmatpush1.msra.mxu0 %v304
    %334 = vmatprep.subr.mxu0 0.0
    %335 = vmatpush1.msra.mxu0 %v305
    %336 = vmatprep.subr.mxu0 0.0
    %337 = vmatpush1.msra.mxu0 %v306
    %338 = vmatprep.subr.mxu0 0.0
    %339 = vmatpush1.msra.mxu0 %v307
    %340 = vmatprep.subr.mxu0 0.0
    %341 = vmatpush1.msra.mxu0 %v308
    %342 = vmatprep.subr.mxu0 0.0
    %343 = vmatpush1.msra.mxu0 %v309
    %344 = vmatprep.subr.mxu0 0.0
    %345 = vmatpush1.msra.mxu0 %v310
    %346 = vmatprep.subr.mxu0 0.0
    %347 = vmatpush1.msra.mxu0 %v311
    %348 = vmatprep.subr.mxu0 0.0
    %349 = vmatpush1.msra.mxu0 %v312
    %350 = vmatprep.subr.mxu0 0.0
    %351 = vmatpush1.msra.mxu0 %v313
    %352 = vmatprep.subr.mxu0 0.0
    %353 = vmatpush1.msra.mxu0 %v314
    %354 = vmatprep.subr.mxu0 0.0
    %355 = vmatpush1.msra.mxu0 %v315
    %356 = vmatprep.subr.mxu0 0.0
    %357 = vmatpush1.msra.mxu0 0.0
    %358 = vmatprep.subr.mxu0 0.0
    %359 = vmatpush1.msra.mxu0 0.0
    %360 = vmatprep.subr.mxu0 0.0
    %361 = vmatpush1.msra.mxu0 0.0
    %362 = vmatprep.subr.mxu0 0.0
    %363 = vmatpush1.msra.mxu0 0.0
    %364 = vmatprep.subr.mxu0 0.0
    %365 = vmatpush1.msra.mxu0 0.0
    %366 = vmatprep.subr.mxu0 0.0
    %367 = vmatpush1.msra.mxu0 0.0
    %368 = vmatprep.subr.mxu0 0.0
    %369 = vmatpush1.msra.mxu0 0.0
    %370 = vmatprep.subr.mxu0 0.0
    %371 = vmatpush1.msra.mxu0 0.0
    %372 = vmatprep.subr.mxu0 0.0
    %373 = vmatpush1.msra.mxu0 0.0
    %374 = vmatprep.subr.mxu0 0.0
    %375 = vmatpush1.msra.mxu0 0.0
    %376 = vmatprep.subr.mxu0 0.0
    %377 = vmatpush1.msra.mxu0 0.0
    %378 = vmatprep.subr.mxu0 0.0
    %379 = vmatpush1.msra.mxu0 0.0
    %380 = vmatprep.subr.mxu0 0.0
    %381 = vmatpush1.msra.mxu0 0.0
    %382 = vmatprep.subr.mxu0 0.0
    %383 = vmatpush1.msra.mxu0 0.0
    %384 = vmatprep.subr.mxu0 0.0
    %385 = vmatpush1.msra.mxu0 0.0
    %386 = vmatprep.subr.mxu0 0.0
    %387 = vmatpush1.msra.mxu0 0.0
    %388 = vmatprep.mubr.f32.mxu0 0.0
    %389 = vmatmul.mubr.f32.gmra.mrb[0].mxu0 %v297
    %v390 = vpop.f32.mrb[0].mxu0
    %v391 = vadd.f32 %v322, %v390
    %v392 = vpop.f32.mrb[0].mxu0
    %393 = vmatprep.mubr.f32.mxu0 0.0
    %394 = vmatmul.mubr.f32.gmra.mrb[0].mxu0 %v298
    %v395 = vpop.f32.mrb[0].mxu0
    %v396 = vadd.f32 %v322, %v395
    %v397 = vpop.f32.mrb[0].mxu0
    %398 = vdwg.mxu0
    %v399 = vmax.f32 %v391, 0.0
    %v400 = vmax.f32 %v396, 0.0
    %v401 = vmul.f32 %v290, %v399
    %v402 = vmul.f32 %v295, %v400
    %s403 = scalar_lea.vmem %s6, 128
    %v404 = vld [vmem:[%s403] sm:$0xff]
    %v405 = vld [vmem:[%s403 + $0x8] sm:$0xff]
    %v406 = vld [vmem:[%s403 + $0x10] sm:$0xff]
    %v407 = vld [vmem:[%s403 + $0x18] sm:$0xff]
    %v408 = vld [vmem:[%s403 + $0x20] sm:$0xff]
    %v409 = vld [vmem:[%s403 + $0x28] sm:$0xff]
    %v410 = vld [vmem:[%s403 + $0x30] sm:$0xff]
    %v411 = vld [vmem:[%s403 + $0x38] sm:$0xff]
    %v412 = vld [vmem:[%s403 + $0x40] sm:$0xff]
    %v413 = vld [vmem:[%s403 + $0x48] sm:$0xff]
    %v414 = vld [vmem:[%s403 + $0x50] sm:$0xff]
    %v415 = vld [vmem:[%s403 + $0x58] sm:$0xff]
    %v416 = vld [vmem:[%s403 + $0x60] sm:$0xff]
    %v417 = vld [vmem:[%s403 + $0x68] sm:$0xff]
    %v418 = vld [vmem:[%s403 + $0x70] sm:$0xff]
    %v419 = vld [vmem:[%s403 + $0x78] sm:$0xff]
    %s420 = scalar_lea.vmem %s7, 1
    %v421 = vld [vmem:[%s420] sm:$0x1]
    %v423 = vlaneseq
    %v424 = vshrl.u32 %v423, 7
    %v425 = vsub.s32 0, %v424
    %v426 = vrot.slane %v421, %v425
    %428 = vmatprep.subr.mxu0 0.0
    %429 = vmatpush1.msra.mxu0 %v404
    %430 = vmatprep.subr.mxu0 0.0
    %431 = vmatpush1.msra.mxu0 %v405
    %432 = vmatprep.subr.mxu0 0.0
    %433 = vmatpush1.msra.mxu0 %v406
    %434 = vmatprep.subr.mxu0 0.0
    %435 = vmatpush1.msra.mxu0 %v407
    %436 = vmatprep.subr.mxu0 0.0
    %437 = vmatpush1.msra.mxu0 %v408
    %438 = vmatprep.subr.mxu0 0.0
    %439 = vmatpush1.msra.mxu0 %v409
    %440 = vmatprep.subr.mxu0 0.0
    %441 = vmatpush1.msra.mxu0 %v410
    %442 = vmatprep.subr.mxu0 0.0
    %443 = vmatpush1.msra.mxu0 %v411
    %444 = vmatprep.subr.mxu0 0.0
    %445 = vmatpush1.msra.mxu0 %v412
    %446 = vmatprep.subr.mxu0 0.0
    %447 = vmatpush1.msra.mxu0 %v413
    %448 = vmatprep.subr.mxu0 0.0
    %449 = vmatpush1.msra.mxu0 %v414
    %450 = vmatprep.subr.mxu0 0.0
    %451 = vmatpush1.msra.mxu0 %v415
    %452 = vmatprep.subr.mxu0 0.0
    %453 = vmatpush1.msra.mxu0 %v416
    %454 = vmatprep.subr.mxu0 0.0
    %455 = vmatpush1.msra.mxu0 %v417
    %456 = vmatprep.subr.mxu0 0.0
    %457 = vmatpush1.msra.mxu0 %v418
    %458 = vmatprep.subr.mxu0 0.0
    %459 = vmatpush1.msra.mxu0 %v419
    %460 = vmatprep.subr.mxu0 0.0
    %461 = vmatpush1.msra.mxu0 0.0
    %462 = vmatprep.subr.mxu0 0.0
    %463 = vmatpush1.msra.mxu0 0.0
    %464 = vmatprep.subr.mxu0 0.0
    %465 = vmatpush1.msra.mxu0 0.0
    %466 = vmatprep.subr.mxu0 0.0
    %467 = vmatpush1.msra.mxu0 0.0
    %468 = vmatprep.subr.mxu0 0.0
    %469 = vmatpush1.msra.mxu0 0.0
    %470 = vmatprep.subr.mxu0 0.0
    %471 = vmatpush1.msra.mxu0 0.0
    %472 = vmatprep.subr.mxu0 0.0
    %473 = vmatpush1.msra.mxu0 0.0
    %474 = vmatprep.subr.mxu0 0.0
    %475 = vmatpush1.msra.mxu0 0.0
    %476 = vmatprep.subr.mxu0 0.0
    %477 = vmatpush1.msra.mxu0 0.0
    %478 = vmatprep.subr.mxu0 0.0
    %479 = vmatpush1.msra.mxu0 0.0
    %480 = vmatprep.subr.mxu0 0.0
    %481 = vmatpush1.msra.mxu0 0.0
    %482 = vmatprep.subr.mxu0 0.0
    %483 = vmatpush1.msra.mxu0 0.0
    %484 = vmatprep.subr.mxu0 0.0
    %485 = vmatpush1.msra.mxu0 0.0
    %486 = vmatprep.subr.mxu0 0.0
    %487 = vmatpush1.msra.mxu0 0.0
    %488 = vmatprep.subr.mxu0 0.0
    %489 = vmatpush1.msra.mxu0 0.0
    %490 = vmatprep.subr.mxu0 0.0
    %491 = vmatpush1.msra.mxu0 0.0
    %492 = vmatprep.mubr.f32.mxu0 0.0
    %493 = vmatmul.mubr.f32.gmra.mrb[0].mxu0 %v401
    %v494 = vpop.f32.mrb[0].mxu0
    %v495 = vadd.f32 %v426, %v494
    %v496 = vpop.f32.mrb[0].mxu0
    %497 = vmatprep.mubr.f32.mxu0 0.0
    %498 = vmatmul.mubr.f32.gmra.mrb[0].mxu0 %v402
    %v499 = vpop.f32.mrb[0].mxu0
    %v500 = vadd.f32 %v426, %v499
    %v501 = vpop.f32.mrb[0].mxu0
    %502 = vdwg.mxu0
    %v503 = vadd.f32 %v495, %v273
    %v504 = vadd.f32 %v500, %v274
    %s505 = sld [smem:[#allocation2 + $0x100]]
    %s506 = sld [smem:[#allocation2 + $0x101]]
    %v507 = vstv %s505
    %v508 = vmul.f32 %v507, %v45
    %v509 = vmul.f32 %v507, %v46
    %v510 = vstv %s506
    %v511 = vmul.f32 %v510, %v47
    %v512 = vmul.f32 %v510, %v48
    %v513 = vadd.f32 %v508, %v511
    %v514 = vadd.f32 %v509, %v512
    %v515 = vrsqrt.pop %v513
    %v516 = vrsqrt.pop %v514
    %518 = vset.pattern.permute.xlu0 0
    %519 = vperm.xlu0 %518, %v515
    %v520 = vpop.permute.xlu0 %519
    %523 = vset.pattern.permute.xlu0 0
    %524 = vperm.xlu0 %523, %v516
    %v525 = vpop.permute.xlu0 %524
    %v527 = vmul.f32 %v520, %v503
    %v528 = vmul.f32 %v525, %v504
    %s529 = scalar_lea.vmem %s4, 256
    %v530 = vld [vmem:[%s529] sm:$0xff]
    %v531 = vld [vmem:[%s529 + $0x8] sm:$0xff]
    %v532 = vld [vmem:[%s529 + $0x10] sm:$0xff]
    %v533 = vld [vmem:[%s529 + $0x18] sm:$0xff]
    %v534 = vld [vmem:[%s529 + $0x20] sm:$0xff]
    %v535 = vld [vmem:[%s529 + $0x28] sm:$0xff]
    %v536 = vld [vmem:[%s529 + $0x30] sm:$0xff]
    %v537 = vld [vmem:[%s529 + $0x38] sm:$0xff]
    %v538 = vld [vmem:[%s529 + $0x40] sm:$0xff]
    %v539 = vld [vmem:[%s529 + $0x48] sm:$0xff]
    %v540 = vld [vmem:[%s529 + $0x50] sm:$0xff]
    %v541 = vld [vmem:[%s529 + $0x58] sm:$0xff]
    %v542 = vld [vmem:[%s529 + $0x60] sm:$0xff]
    %v543 = vld [vmem:[%s529 + $0x68] sm:$0xff]
    %v544 = vld [vmem:[%s529 + $0x70] sm:$0xff]
    %v545 = vld [vmem:[%s529 + $0x78] sm:$0xff]
    %s546 = scalar_lea.vmem %s5, 2
    %v547 = vld [vmem:[%s546] sm:$0x1]
    %v549 = vlaneseq
    %v550 = vshrl.u32 %v549, 7
    %v551 = vsub.s32 0, %v550
    %v552 = vrot.slane %v547, %v551
    %554 = vmatprep.subr.mxu0 0.0
    %555 = vmatpush1.msra.mxu0 %v530
    %556 = vmatprep.subr.mxu0 0.0
    %557 = vmatpush1.msra.mxu0 %v531
    %558 = vmatprep.subr.mxu0 0.0
    %559 = vmatpush1.msra.mxu0 %v532
    %560 = vmatprep.subr.mxu0 0.0
    %561 = vmatpush1.msra.mxu0 %v533
    %562 = vmatprep.subr.mxu0 0.0
    %563 = vmatpush1.msra.mxu0 %v534
    %564 = vmatprep.subr.mxu0 0.0
    %565 = vmatpush1.msra.mxu0 %v535
    %566 = vmatprep.subr.mxu0 0.0
    %567 = vmatpush1.msra.mxu0 %v536
    %568 = vmatprep.subr.mxu0 0.0
    %569 = vmatpush1.msra.mxu0 %v537
    %570 = vmatprep.subr.mxu0 0.0
    %571 = vmatpush1.msra.mxu0 %v538
    %572 = vmatprep.subr.mxu0 0.0
    %573 = vmatpush1.msra.mxu0 %v539
    %574 = vmatprep.subr.mxu0 0.0
    %575 = vmatpush1.msra.mxu0 %v540
    %576 = vmatprep.subr.mxu0 0.0
    %577 = vmatpush1.msra.mxu0 %v541
    %578 = vmatprep.subr.mxu0 0.0
    %579 = vmatpush1.msra.mxu0 %v542
    %580 = vmatprep.subr.mxu0 0.0
    %581 = vmatpush1.msra.mxu0 %v543
    %582 = vmatprep.subr.mxu0 0.0
    %583 = vmatpush1.msra.mxu0 %v544
    %584 = vmatprep.subr.mxu0 0.0
    %585 = vmatpush1.msra.mxu0 %v545
    %586 = vmatprep.subr.mxu0 0.0
    %587 = vmatpush1.msra.mxu0 0.0
    %588 = vmatprep.subr.mxu0 0.0
    %589 = vmatpush1.msra.mxu0 0.0
    %590 = vmatprep.subr.mxu0 0.0
    %591 = vmatpush1.msra.mxu0 0.0
    %592 = vmatprep.subr.mxu0 0.0
    %593 = vmatpush1.msra.mxu0 0.0
    %594 = vmatprep.subr.mxu0 0.0
    %595 = vmatpush1.msra.mxu0 0.0
    %596 = vmatprep.subr.mxu0 0.0
    %597 = vmatpush1.msra.mxu0 0.0
    %598 = vmatprep.subr.mxu0 0.0
    %599 = vmatpush1.msra.mxu0 0.0
    %600 = vmatprep.subr.mxu0 0.0
    %601 = vmatpush1.msra.mxu0 0.0
    %602 = vmatprep.subr.mxu0 0.0
    %603 = vmatpush1.msra.mxu0 0.0
    %604 = vmatprep.subr.mxu0 0.0
    %605 = vmatpush1.msra.mxu0 0.0
    %606 = vmatprep.subr.mxu0 0.0
    %607 = vmatpush1.msra.mxu0 0.0
    %608 = vmatprep.subr.mxu0 0.0
    %609 = vmatpush1.msra.mxu0 0.0
    %610 = vmatprep.subr.mxu0 0.0
    %611 = vmatpush1.msra.mxu0 0.0
    %612 = vmatprep.subr.mxu0 0.0
    %613 = vmatpush1.msra.mxu0 0.0
    %614 = vmatprep.subr.mxu0 0.0
    %615 = vmatpush1.msra.mxu0 0.0
    %616 = vmatprep.subr.mxu0 0.0
    %617 = vmatpush1.msra.mxu0 0.0
    %618 = vmatprep.mubr.f32.mxu0 0.0
    %619 = vmatmul.mubr.f32.gmra.mrb[0].mxu0 %v527
    %v620 = vpop.f32.mrb[0].mxu0
    %v621 = vadd.f32 %v552, %v620
    %v622 = vpop.f32.mrb[0].mxu0
    %623 = vmatprep.mubr.f32.mxu0 0.0
    %624 = vmatmul.mubr.f32.gmra.mrb[0].mxu0 %v528
    %v625 = vpop.f32.mrb[0].mxu0
    %v626 = vadd.f32 %v552, %v625
    %v627 = vpop.f32.mrb[0].mxu0
    %628 = vdwg.mxu0
    %v629 = vmax.f32 %v621, 0.0
    %v630 = vmax.f32 %v626, 0.0
    %v631 = vmul.f32 %v520, %v629
    %v632 = vmul.f32 %v525, %v630
    %s633 = scalar_lea.vmem %s6, 256
    %v634 = vld [vmem:[%s633] sm:$0xff]
    %v635 = vld [vmem:[%s633 + $0x8] sm:$0xff]
    %v636 = vld [vmem:[%s633 + $0x10] sm:$0xff]
    %v637 = vld [vmem:[%s633 + $0x18] sm:$0xff]
    %v638 = vld [vmem:[%s633 + $0x20] sm:$0xff]
    %v639 = vld [vmem:[%s633 + $0x28] sm:$0xff]
    %v640 = vld [vmem:[%s633 + $0x30] sm:$0xff]
    %v641 = vld [vmem:[%s633 + $0x38] sm:$0xff]
    %v642 = vld [vmem:[%s633 + $0x40] sm:$0xff]
    %v643 = vld [vmem:[%s633 + $0x48] sm:$0xff]
    %v644 = vld [vmem:[%s633 + $0x50] sm:$0xff]
    %v645 = vld [vmem:[%s633 + $0x58] sm:$0xff]
    %v646 = vld [vmem:[%s633 + $0x60] sm:$0xff]
    %v647 = vld [vmem:[%s633 + $0x68] sm:$0xff]
    %v648 = vld [vmem:[%s633 + $0x70] sm:$0xff]
    %v649 = vld [vmem:[%s633 + $0x78] sm:$0xff]
    %s650 = scalar_lea.vmem %s7, 2
    %v651 = vld [vmem:[%s650] sm:$0x1]
    %v653 = vlaneseq
    %v654 = vshrl.u32 %v653, 7
    %v655 = vsub.s32 0, %v654
    %v656 = vrot.slane %v651, %v655
    %658 = vmatprep.subr.mxu0 0.0
    %659 = vmatpush1.msra.mxu0 %v634
    %660 = vmatprep.subr.mxu0 0.0
    %661 = vmatpush1.msra.mxu0 %v635
    %662 = vmatprep.subr.mxu0 0.0
    %663 = vmatpush1.msra.mxu0 %v636
    %664 = vmatprep.subr.mxu0 0.0
    %665 = vmatpush1.msra.mxu0 %v637
    %666 = vmatprep.subr.mxu0 0.0
    %667 = vmatpush1.msra.mxu0 %v638
    %668 = vmatprep.subr.mxu0 0.0
    %669 = vmatpush1.msra.mxu0 %v639
    %670 = vmatprep.subr.mxu0 0.0
    %671 = vmatpush1.msra.mxu0 %v640
    %672 = vmatprep.subr.mxu0 0.0
    %673 = vmatpush1.msra.mxu0 %v641
    %674 = vmatprep.subr.mxu0 0.0
    %675 = vmatpush1.msra.mxu0 %v642
    %676 = vmatprep.subr.mxu0 0.0
    %677 = vmatpush1.msra.mxu0 %v643
    %678 = vmatprep.subr.mxu0 0.0
    %679 = vmatpush1.msra.mxu0 %v644
    %680 = vmatprep.subr.mxu0 0.0
    %681 = vmatpush1.msra.mxu0 %v645
    %682 = vmatprep.subr.mxu0 0.0
    %683 = vmatpush1.msra.mxu0 %v646
    %684 = vmatprep.subr.mxu0 0.0
    %685 = vmatpush1.msra.mxu0 %v647
    %686 = vmatprep.subr.mxu0 0.0
    %687 = vmatpush1.msra.mxu0 %v648
    %688 = vmatprep.subr.mxu0 0.0
    %689 = vmatpush1.msra.mxu0 %v649
    %690 = vmatprep.subr.mxu0 0.0
    %691 = vmatpush1.msra.mxu0 0.0
    %692 = vmatprep.subr.mxu0 0.0
    %693 = vmatpush1.msra.mxu0 0.0
    %694 = vmatprep.subr.mxu0 0.0
    %695 = vmatpush1.msra.mxu0 0.0
    %696 = vmatprep.subr.mxu0 0.0
    %697 = vmatpush1.msra.mxu0 0.0
    %698 = vmatprep.subr.mxu0 0.0
    %699 = vmatpush1.msra.mxu0 0.0
    %700 = vmatprep.subr.mxu0 0.0
    %701 = vmatpush1.msra.mxu0 0.0
    %702 = vmatprep.subr.mxu0 0.0
    %703 = vmatpush1.msra.mxu0 0.0
    %704 = vmatprep.subr.mxu0 0.0
    %705 = vmatpush1.msra.mxu0 0.0
    %706 = vmatprep.subr.mxu0 0.0
    %707 = vmatpush1.msra.mxu0 0.0
    %708 = vmatprep.subr.mxu0 0.0
    %709 = vmatpush1.msra.mxu0 0.0
    %710 = vmatprep.subr.mxu0 0.0
    %711 = vmatpush1.msra.mxu0 0.0
    %712 = vmatprep.subr.mxu0 0.0
    %713 = vmatpush1.msra.mxu0 0.0
    %714 = vmatprep.subr.mxu0 0.0
    %715 = vmatpush1.msra.mxu0 0.0
    %716 = vmatprep.subr.mxu0 0.0
    %717 = vmatpush1.msra.mxu0 0.0
    %718 = vmatprep.subr.mxu0 0.0
    %719 = vmatpush1.msra.mxu0 0.0
    %720 = vmatprep.subr.mxu0 0.0
    %721 = vmatpush1.msra.mxu0 0.0
    %722 = vmatprep.mubr.f32.mxu0 0.0
    %723 = vmatmul.mubr.f32.gmra.mrb[0].mxu0 %v631
    %v724 = vpop.f32.mrb[0].mxu0
    %v725 = vadd.f32 %v656, %v724
    %v726 = vpop.f32.mrb[0].mxu0
    %727 = vmatprep.mubr.f32.mxu0 0.0
    %728 = vmatmul.mubr.f32.gmra.mrb[0].mxu0 %v632
    %v729 = vpop.f32.mrb[0].mxu0
    %v730 = vadd.f32 %v656, %v729
    %v731 = vpop.f32.mrb[0].mxu0
    %732 = vdwg.mxu0
    %v733 = vadd.f32 %v725, %v503
    %v734 = vadd.f32 %v730, %v504
    %735 = vst [vmem:[#allocation5] sm:$0xff] %v733
    %736 = vst [vmem:[#allocation5 + $0x8] sm:$0xff] %v734
    // Predicated region
    $region38: #{kgcn_forward.1} parent=1 // pred_check
      _
    $region39: #{kgcn_forward.1} parent=1 // pred_check_branch
      %738 = sbr.rel (0) target = $region41
    $region40: #{kgcn_forward.1} parent=1 // pred_region
      %s740 = ssub.s32 256, 256
      %741 = vsyncadd [#allocation3], %s740
      %s742 = sshll.u32 [#allocation5], 4
      %s743 = int_to_ptr.vmem [resolvable:$true] %s742
      %748 = dma.vmem_to_hbm [thread:$0]  %s743, 256, %s8, [#allocation3], 128, 128, 8
    $region41: #{kgcn_forward.1} parent=1 // pred_fallthru
      _
    // Predicated region
    $region42: #{kgcn_forward.1} parent=1 // pred_check
      _
    $region43: #{kgcn_forward.1} parent=1 // pred_check_branch
      %750 = sbr.rel (0) target = $region45
    $region44: #{kgcn_forward.1} parent=1 // pred_region
      %751 = dma.done [#allocation3], 256
    $region45: #{kgcn_forward.1} parent=1 // pred_fallthru
      _
    %752 = vsyncpa [#allocation3], 1
    %753 = vsyncpa [#allocation4], 1

</llo_original>
